<compile_context>
chip_gen: v5e
topology: v5e:2x2
jax: 0.10.0
libtpu: 0.0.40
codegen_flags: <defaults>
</compile_context>

<pallas_src>
import functools

import jax
import jax.numpy as jnp
from jax import lax
from jax.experimental import pallas as pl
from jax.experimental.pallas import tpu as pltpu


def _round_up(x, m):
    return ((x + m - 1) // m) * m


def _embbag_fc_kernel(tok_ref, bag_ref, table_ref, w_ref, b_ref, inv_ref,
                      out_ref, counts_ref, acc_ref, *, n_bags, v_tile, chunk):
    v = pl.program_id(0)              # vocab-tile index (outer)
    c = pl.program_id(1)              # token-chunk index (inner)
    n_v = pl.num_programs(0)
    n_c = pl.num_programs(1)

    @pl.when((v == 0) & (c == 0))
    def _():
        acc_ref[...] = jnp.zeros_like(acc_ref)

    @pl.when(c == 0)
    def _():
        counts_ref[...] = jnp.zeros_like(counts_ref)

    tok = tok_ref[...]                # (K, 1) int32; padded slots hold 0
    bag = bag_ref[...]                # (1, K) int32; padded slots hold -1

    # One-hots built with 2-D iota + compare on the VPU, cast to bf16
    # (values are exactly 0/1 -> lossless, 2x MXU rate, half the footprint).
    onehot_bag = (lax.broadcasted_iota(jnp.int32, (n_bags, chunk), 0) == bag
                  ).astype(jnp.bfloat16)                                  # (B, K)
    # (K, VT) layout: MXU contracts over K on the sublane dim, no transpose.
    tok_rel = tok - v * v_tile
    onehot_tok = (lax.broadcasted_iota(jnp.int32, (chunk, v_tile), 1) == tok_rel
                  ).astype(jnp.bfloat16)                                  # (K, VT)

    # counts[b, u] += #tokens with vocab id (v*VT + u) in bag b (this chunk).
    # Padded tokens (bag == -1) produce an all-zero one-hot column -> no-op.
    counts_ref[...] += jnp.dot(onehot_bag, onehot_tok,
                               preferred_element_type=jnp.float32)        # (B, VT)

    # Deferred segment-sum of embeddings: once per vocab tile, not per chunk.
    @pl.when(c == n_c - 1)
    def _():
        acc_ref[...] += jnp.dot(counts_ref[...], table_ref[...],
                                preferred_element_type=jnp.float32)       # (B, D)

    # Fused mean + Linear epilogue on the very last grid step.
    @pl.when((v == n_v - 1) & (c == n_c - 1))
    def _():
        mean = acc_ref[...] * inv_ref[...]                                # (B, D)
        logits = jnp.dot(mean, w_ref[...],
                         preferred_element_type=jnp.float32)              # (B, C)
        out_ref[...] = (logits + b_ref[...]).astype(out_ref.dtype)


def make_text_classifier(emb_weight, fc_weight, fc_bias, *, chunk=1024, v_tile=512):
    """Builds forward(text, offsets) -> (num_bags, num_class) logits.

    Padded, lane/sublane-dense copies of the weights are made ONCE here
    (hoisted out of the per-call path, per perf review).
    """
    V, D = emb_weight.shape
    C = fc_weight.shape[0]

    VT = min(_round_up(v_tile, 128), _round_up(V, 128))   # vocab tile
    V_pad = _round_up(V, VT)
    D_pad = _round_up(D, 128)
    C_pad = _round_up(C, 128)
    n_vtiles = V_pad // VT

    table = jnp.zeros((V_pad, D_pad), jnp.float32).at[:V, :D].set(
        emb_weight.astype(jnp.float32))
    w_t = jnp.zeros((D_pad, C_pad), jnp.float32).at[:D, :C].set(
        fc_weight.T.astype(jnp.float32))
    bias = jnp.zeros((1, C_pad), jnp.float32).at[0, :C].set(
        fc_bias.astype(jnp.float32))

    chunk_hint = _round_up(chunk, 128)

    def forward(text, offsets):
        T = int(text.shape[0])
        B = int(offsets.shape[0])

        K = min(chunk_hint, _round_up(max(T, 1), 128))     # tokens per grid step
        T_pad = _round_up(max(T, 1), K)
        B_pad = _round_up(B, 8)
        n_chunks = T_pad // K

        text32 = text.astype(jnp.int32)
        offsets32 = offsets.astype(jnp.int32)

        # Per-token bag ids (EmbeddingBag offsets semantics); pad slots get -1
        # so they contribute nothing.
        positions = jnp.arange(T, dtype=jnp.int32)
        bag_ids = (jnp.searchsorted(offsets32, positions, side="right") - 1
                   ).astype(jnp.int32)
        tok_col = jnp.zeros((T_pad, 1), jnp.int32).at[:T, 0].set(text32)
        bag_row = jnp.full((1, T_pad), -1, jnp.int32).at[0, :T].set(bag_ids)

        # Per-bag 1/count (empty bag -> 0, matching torch EmbeddingBag 'mean').
        offsets_ext = jnp.concatenate([offsets32, jnp.array([T], jnp.int32)])
        counts = (offsets_ext[1:] - offsets_ext[:-1]).astype(jnp.float32)
        inv_counts = jnp.where(counts > 0, 1.0 / jnp.maximum(counts, 1.0), 0.0)
        inv_pad = jnp.zeros((B_pad, 1), jnp.float32).at[:B, 0].set(inv_counts)

        kernel = functools.partial(_embbag_fc_kernel,
                                   n_bags=B_pad, v_tile=VT, chunk=K)

        # Explicit VMEM budget: double-buffered blocks + one-hot temporaries
        # + scratch, with headroom (scoped defaults are 16/32 MiB).
        est = (2 * (K * 4 + K * 4)                        # token / bag blocks
               + 2 * VT * D_pad * 4                       # table tile (pipelined)
               + 2 * (D_pad * C_pad * 4 + C_pad * 4 + B_pad * 4)
               + 2 * B_pad * C_pad * 4                    # output block
               + B_pad * VT * 4 + B_pad * D_pad * 4       # counts / acc scratch
               + K * VT * 2 + B_pad * K * 2)              # bf16 one-hot temps
        vmem_limit = int(min(max(4 * est, 32 * 2 ** 20), 60 * 2 ** 20))

        out_padded = pl.pallas_call(
            kernel,
            out_shape=jax.ShapeDtypeStruct((B_pad, C_pad), jnp.float32),
            grid_spec=pltpu.PrefetchScalarGridSpec(
                num_scalar_prefetch=0,
                grid=(n_vtiles, n_chunks),
                in_specs=[
                    pl.BlockSpec((K, 1), lambda v, c: (c, 0)),          # token ids
                    pl.BlockSpec((1, K), lambda v, c: (0, c)),          # bag ids
                    pl.BlockSpec((VT, D_pad), lambda v, c: (v, 0)),     # table tile
                    # Grid-invariant small operands: constant block index, so
                    # Pallas does not re-DMA them across grid steps.
                    pl.BlockSpec((D_pad, C_pad), lambda v, c: (0, 0)),  # fc weight^T
                    pl.BlockSpec((1, C_pad), lambda v, c: (0, 0)),      # fc bias
                    pl.BlockSpec((B_pad, 1), lambda v, c: (0, 0)),      # 1/bag_count
                ],
                out_specs=pl.BlockSpec((B_pad, C_pad), lambda v, c: (0, 0)),
                scratch_shapes=[pltpu.VMEM((B_pad, VT), jnp.float32),     # counts
                                pltpu.VMEM((B_pad, D_pad), jnp.float32)], # acc
            ),
            compiler_params=pltpu.CompilerParams(
                # Shared counts/acc accumulators => both axes sequential.
                dimension_semantics=("arbitrary", "arbitrary"),
                vmem_limit_bytes=vmem_limit,
            ),
        )(tok_col, bag_row, table, w_t, bias, inv_pad)

        return out_padded[:B, :C]

    return forward


if __name__ == "__main__":
    # Small shapes consistent with the module.
    vocab_size, embed_dim, num_class = 50, 32, 4
    batch, seq_total = 2, 8

    key = jax.random.PRNGKey(0)
    k_emb, k_fc, k_text = jax.random.split(key, 3)

    # Deterministic init mirroring init_weights(): uniform(-0.5, 0.5), bias zero.
    initrange = 0.5
    emb_weight = jax.random.uniform(k_emb, (vocab_size, embed_dim), jnp.float32,
                                    -initrange, initrange)
    fc_weight = jax.random.uniform(k_fc, (num_class, embed_dim), jnp.float32,
                                   -initrange, initrange)
    fc_bias = jnp.zeros((num_class,), jnp.float32)

    text = jax.random.randint(k_text, (seq_total,), 0, vocab_size, dtype=jnp.int32)
    offsets = jnp.array([0, 5], dtype=jnp.int32)   # two bags: sizes 5 and 3

    forward = make_text_classifier(emb_weight, fc_weight, fc_bias)
    out = jax.block_until_ready(forward(text, offsets))

    # Pure-JAX reference (EmbeddingBag 'mean' + Linear).
    gathered = emb_weight[text]                                        # (T, D)
    bag_ids = jnp.searchsorted(offsets, jnp.arange(seq_total), side="right") - 1
    seg = (bag_ids[None, :] == jnp.arange(batch)[:, None]).astype(jnp.float32)
    cnt = jnp.maximum(seg.sum(axis=1, keepdims=True), 1.0)
    ref = ((seg @ gathered) / cnt) @ fc_weight.T + fc_bias             # (B, C)

    assert out.shape == (batch, num_class)
    assert jnp.allclose(out, ref, atol=1e-5), (out, ref)
    print("KERNEL_OK")
</pallas_src>

<mosaic_0001>
module attributes {stable_mosaic.version = 11 : i64} {
  func.func @_embbag_fc_kernel(%arg0: i32, %arg1: i32, %arg2: memref<128x1xi32, #tpu.memory_space<vmem>>, %arg3: memref<1x128xi32, #tpu.memory_space<vmem>>, %arg4: memref<128x128xf32, #tpu.memory_space<vmem>>, %arg5: memref<128x128xf32, #tpu.memory_space<vmem>>, %arg6: memref<1x128xf32, #tpu.memory_space<vmem>>, %arg7: memref<8x1xf32, #tpu.memory_space<vmem>>, %arg8: memref<8x128xf32, #tpu.memory_space<vmem>>, %arg9: memref<8x128xf32, #tpu.memory_space<vmem>>, %arg10: memref<8x128xf32, #tpu.memory_space<vmem>>) attributes {dimension_semantics = [#tpu.dimension_semantics<arbitrary>, #tpu.dimension_semantics<arbitrary>], iteration_bounds = array<i64: 1, 1>, scalar_prefetch = 0 : i64, scratch_operands = 2 : i64, tpu.core_type = #tpu.core_type<tc>, window_params = [{transform_indices = @transform_0, window_bounds = array<i64: 128, 1>}, {transform_indices = @transform_1, window_bounds = array<i64: 1, 128>}, {transform_indices = @transform_2, window_bounds = array<i64: 128, 128>}, {pipeline_mode = #tpu.pipeline_mode<synchronous>, transform_indices = @transform_3, window_bounds = array<i64: 128, 128>}, {pipeline_mode = #tpu.pipeline_mode<synchronous>, transform_indices = @transform_4, window_bounds = array<i64: 1, 128>}, {pipeline_mode = #tpu.pipeline_mode<synchronous>, transform_indices = @transform_5, window_bounds = array<i64: 8, 1>}, {pipeline_mode = #tpu.pipeline_mode<synchronous>, transform_indices = @transform_6, window_bounds = array<i64: 8, 128>}]} {
    %c0_i32 = arith.constant 0 : i32
    %0 = arith.cmpi eq, %arg0, %c0_i32 : i32
    %c0_i32_0 = arith.constant 0 : i32
    %1 = arith.cmpi eq, %arg1, %c0_i32_0 : i32
    %2 = arith.andi %0, %1 : i1
    %3 = arith.extui %2 : i1 to i32
    %c0_i32_1 = arith.constant 0 : i32
    %4 = arith.cmpi ne, %3, %c0_i32_1 : i32
    scf.if %4 {
      %cst_16 = arith.constant 0.000000e+00 : f32
      %37 = vector.broadcast %cst_16 : f32 to vector<8x128xf32>
      %c0_17 = arith.constant 0 : index
      %c0_18 = arith.constant 0 : index
      %38 = vector.load %arg10[%c0_17, %c0_18] : memref<8x128xf32, #tpu.memory_space<vmem>>, vector<8x128xf32>
      tpu.vector_store %arg10[%c0_17, %c0_18], %37 {strides = array<i32>} : memref<8x128xf32, #tpu.memory_space<vmem>>, vector<8x128xf32>,
    } else {
    }
    %c0_i32_2 = arith.constant 0 : i32
    %5 = arith.cmpi eq, %arg1, %c0_i32_2 : i32
    %6 = arith.extui %5 : i1 to i32
    %c0_i32_3 = arith.constant 0 : i32
    %7 = arith.cmpi ne, %6, %c0_i32_3 : i32
    scf.if %7 {
      %cst_16 = arith.constant 0.000000e+00 : f32
      %37 = vector.broadcast %cst_16 : f32 to vector<8x128xf32>
      %c0_17 = arith.constant 0 : index
      %c0_18 = arith.constant 0 : index
      %38 = vector.load %arg9[%c0_17, %c0_18] : memref<8x128xf32, #tpu.memory_space<vmem>>, vector<8x128xf32>
      tpu.vector_store %arg9[%c0_17, %c0_18], %37 {strides = array<i32>} : memref<8x128xf32, #tpu.memory_space<vmem>>, vector<8x128xf32>,
    } else {
    }
    %c0 = arith.constant 0 : index
    %c0_4 = arith.constant 0 : index
    %8 = vector.load %arg2[%c0, %c0_4] : memref<128x1xi32, #tpu.memory_space<vmem>>, vector<128x1xi32>
    %c0_5 = arith.constant 0 : index
    %c0_6 = arith.constant 0 : index
    %9 = vector.load %arg3[%c0_5, %c0_6] : memref<1x128xi32, #tpu.memory_space<vmem>>, vector<1x128xi32>
    %10 = tpu.iota {dimensions = array<i32: 0>} : vector<8x128xi32>
    %11 = vector.broadcast %9 : vector<1x128xi32> to vector<8x128xi32>
    %12 = arith.cmpi eq, %10, %11 : vector<8x128xi32>
    %13 = arith.extui %12 : vector<8x128xi1> to vector<8x128xi32>
    %14 = arith.sitofp %13 : vector<8x128xi32> to vector<8x128xf32>
    %15 = arith.truncf %14 : vector<8x128xf32> to vector<8x128xbf16>
    %c128_i32 = arith.constant 128 : i32
    %16 = arith.muli %arg0, %c128_i32 : i32
    %17 = vector.broadcast %16 : i32 to vector<128x1xi32>
    %18 = arith.subi %8, %17 : vector<128x1xi32>
    %19 = tpu.iota {dimensions = array<i32: 1>} : vector<128x128xi32>
    %20 = vector.broadcast %18 : vector<128x1xi32> to vector<128x128xi32>
    %21 = arith.cmpi eq, %19, %20 : vector<128x128xi32>
    %22 = arith.extui %21 : vector<128x128xi1> to vector<128x128xi32>
    %23 = arith.sitofp %22 : vector<128x128xi32> to vector<128x128xf32>
    %24 = arith.truncf %23 : vector<128x128xf32> to vector<128x128xbf16>
    %c0_7 = arith.constant 0 : index
    %c0_8 = arith.constant 0 : index
    %25 = vector.load %arg9[%c0_7, %c0_8] : memref<8x128xf32, #tpu.memory_space<vmem>>, vector<8x128xf32>
    %cst = arith.constant dense<0.000000e+00> : vector<8x128xf32>
    %26 = tpu.matmul %15, %24, %cst {dimension_numbers = #tpu.dot_dimension_numbers<[1], [0], [0], [1], [0, 0, 1, 1], [], []>} : vector<8x128xbf16>, vector<128x128xbf16>, vector<8x128xf32> -> vector<8x128xf32>
    %27 = arith.addf %25, %26 : vector<8x128xf32>
    %c0_9 = arith.constant 0 : index
    %c0_10 = arith.constant 0 : index
    %28 = vector.load %arg9[%c0_9, %c0_10] : memref<8x128xf32, #tpu.memory_space<vmem>>, vector<8x128xf32>
    tpu.vector_store %arg9[%c0_9, %c0_10], %27 {strides = array<i32>} : memref<8x128xf32, #tpu.memory_space<vmem>>, vector<8x128xf32>,
    %c0_i32_11 = arith.constant 0 : i32
    %29 = arith.cmpi eq, %arg1, %c0_i32_11 : i32
    %30 = arith.extui %29 : i1 to i32
    %c0_i32_12 = arith.constant 0 : i32
    %31 = arith.cmpi ne, %30, %c0_i32_12 : i32
    scf.if %31 {
      %c0_16 = arith.constant 0 : index
      %c0_17 = arith.constant 0 : index
      %37 = vector.load %arg10[%c0_16, %c0_17] : memref<8x128xf32, #tpu.memory_space<vmem>>, vector<8x128xf32>
      %c0_18 = arith.constant 0 : index
      %c0_19 = arith.constant 0 : index
      %38 = vector.load %arg9[%c0_18, %c0_19] : memref<8x128xf32, #tpu.memory_space<vmem>>, vector<8x128xf32>
      %c0_20 = arith.constant 0 : index
      %c0_21 = arith.constant 0 : index
      %39 = vector.load %arg4[%c0_20, %c0_21] : memref<128x128xf32, #tpu.memory_space<vmem>>, vector<128x128xf32>
      %cst_22 = arith.constant dense<0.000000e+00> : vector<8x128xf32>
      %40 = tpu.matmul %38, %39, %cst_22 {dimension_numbers = #tpu.dot_dimension_numbers<[1], [0], [0], [1], [0, 0, 1, 1], [], []>} : vector<8x128xf32>, vector<128x128xf32>, vector<8x128xf32> -> vector<8x128xf32>
      %41 = arith.addf %37, %40 : vector<8x128xf32>
      %c0_23 = arith.constant 0 : index
      %c0_24 = arith.constant 0 : index
      %42 = vector.load %arg10[%c0_23, %c0_24] : memref<8x128xf32, #tpu.memory_space<vmem>>, vector<8x128xf32>
      tpu.vector_store %arg10[%c0_23, %c0_24], %41 {strides = array<i32>} : memref<8x128xf32, #tpu.memory_space<vmem>>, vector<8x128xf32>,
    } else {
    }
    %c0_i32_13 = arith.constant 0 : i32
    %32 = arith.cmpi eq, %arg0, %c0_i32_13 : i32
    %c0_i32_14 = arith.constant 0 : i32
    %33 = arith.cmpi eq, %arg1, %c0_i32_14 : i32
    %34 = arith.andi %32, %33 : i1
    %35 = arith.extui %34 : i1 to i32
    %c0_i32_15 = arith.constant 0 : i32
    %36 = arith.cmpi ne, %35, %c0_i32_15 : i32
    scf.if %36 {
      %c0_16 = arith.constant 0 : index
      %c0_17 = arith.constant 0 : index
      %37 = vector.load %arg10[%c0_16, %c0_17] : memref<8x128xf32, #tpu.memory_space<vmem>>, vector<8x128xf32>
      %c0_18 = arith.constant 0 : index
      %c0_19 = arith.constant 0 : index
      %38 = vector.load %arg7[%c0_18, %c0_19] : memref<8x1xf32, #tpu.memory_space<vmem>>, vector<8x1xf32>
      %39 = vector.broadcast %38 : vector<8x1xf32> to vector<8x128xf32>
      %40 = arith.mulf %37, %39 : vector<8x128xf32>
      %c0_20 = arith.constant 0 : index
      %c0_21 = arith.constant 0 : index
      %41 = vector.load %arg5[%c0_20, %c0_21] : memref<128x128xf32, #tpu.memory_space<vmem>>, vector<128x128xf32>
      %cst_22 = arith.constant dense<0.000000e+00> : vector<8x128xf32>
      %42 = tpu.matmul %40, %41, %cst_22 {dimension_numbers = #tpu.dot_dimension_numbers<[1], [0], [0], [1], [0, 0, 1, 1], [], []>} : vector<8x128xf32>, vector<128x128xf32>, vector<8x128xf32> -> vector<8x128xf32>
      %c0_23 = arith.constant 0 : index
      %c0_24 = arith.constant 0 : index
      %43 = vector.load %arg6[%c0_23, %c0_24] : memref<1x128xf32, #tpu.memory_space<vmem>>, vector<1x128xf32>
      %44 = vector.broadcast %43 : vector<1x128xf32> to vector<8x128xf32>
      %45 = arith.addf %42, %44 : vector<8x128xf32>
      %c0_25 = arith.constant 0 : index
      %c0_26 = arith.constant 0 : index
      %46 = vector.load %arg8[%c0_25, %c0_26] : memref<8x128xf32, #tpu.memory_space<vmem>>, vector<8x128xf32>
      tpu.vector_store %arg8[%c0_25, %c0_26], %45 {strides = array<i32>} : memref<8x128xf32, #tpu.memory_space<vmem>>, vector<8x128xf32>,
    } else {
    }
    return
  }
  func.func @transform_0(%arg0: i32, %arg1: i32) -> (i32, i32) {
    %c0_i32 = arith.constant 0 : i32
    %c0_i32_0 = arith.constant 0 : i32
    return %arg1, %c0_i32 : i32, i32
  }
  func.func @transform_1(%arg0: i32, %arg1: i32) -> (i32, i32) {
    %c0_i32 = arith.constant 0 : i32
    %c0_i32_0 = arith.constant 0 : i32
    return %c0_i32, %arg1 : i32, i32
  }
  func.func @transform_2(%arg0: i32, %arg1: i32) -> (i32, i32) {
    %c0_i32 = arith.constant 0 : i32
    %c0_i32_0 = arith.constant 0 : i32
    return %arg0, %c0_i32 : i32, i32
  }
  func.func @transform_3(%arg0: i32, %arg1: i32) -> (i32, i32) {
    %c0_i32 = arith.constant 0 : i32
    %c0_i32_0 = arith.constant 0 : i32
    %c0_i32_1 = arith.constant 0 : i32
    return %c0_i32, %c0_i32_0 : i32, i32
  }
  func.func @transform_4(%arg0: i32, %arg1: i32) -> (i32, i32) {
    %c0_i32 = arith.constant 0 : i32
    %c0_i32_0 = arith.constant 0 : i32
    %c0_i32_1 = arith.constant 0 : i32
    return %c0_i32, %c0_i32_0 : i32, i32
  }
  func.func @transform_5(%arg0: i32, %arg1: i32) -> (i32, i32) {
    %c0_i32 = arith.constant 0 : i32
    %c0_i32_0 = arith.constant 0 : i32
    %c0_i32_1 = arith.constant 0 : i32
    return %c0_i32, %c0_i32_0 : i32, i32
  }
  func.func @transform_6(%arg0: i32, %arg1: i32) -> (i32, i32) {
    %c0_i32 = arith.constant 0 : i32
    %c0_i32_0 = arith.constant 0 : i32
    %c0_i32_1 = arith.constant 0 : i32
    return %c0_i32, %c0_i32_0 : i32, i32
  }
}

</mosaic_0001>

<llo_original>
// kernel: tpu_custom_call.1
$region0: #{tpu_custom_call.1}
  #allocation0 [shape = 'u32[]', space=smem, size = 0x4, offset = 0x4, fixed_abs, tag = 'smem constant byte address 0x4 - core index']
  #allocation1 [shape = 'u32[72,128]{1,0:T(1,128)}', space=vmem, size = 0x9000, scoped, tag = 'internal scratch']
  #allocation2 [shape = 'f32[8,128]{1,0:T(8,128)}', space=vmem, size = 0x1000, scoped, tag = 'scratch operand']
  #allocation3 [shape = 'f32[8,128]{1,0:T(8,128)}', space=vmem, size = 0x1000, scoped, tag = 'scratch operand']
  %s0 = inlined_call_operand.vmem [shape: s32[128,1], index: 0, kind: input, shape index: {}]
  %s1 = inlined_call_operand.vmem [shape: s32[1,128], index: 1, kind: input, shape index: {}]
  %s2 = inlined_call_operand.vmem [shape: f32[128,128], index: 2, kind: input, shape index: {}]
  %s3 = inlined_call_operand.hbm [shape: f32[128,128], index: 3, kind: input, shape index: {}]
  %s4 = inlined_call_operand.vmem [shape: f32[1,128], index: 4, kind: input, shape index: {}]
  %s5 = inlined_call_operand.vmem [shape: f32[8,1], index: 5, kind: input, shape index: {}]
  %s6 = inlined_call_operand.hbm [shape: f32[8,128], index: 6, kind: output, shape index: {}]
  %s7 = sld [smem:[#allocation0]]
  $region54: #{tpu_custom_call.1} parent=0
    _
  %s9 = ssub.s32 1, %s7
  %s10 = scalar_select 0, %s9, %s7
  $region1: #{tpu_custom_call.1} parent=0
    #allocation4 [shape = 'u8[65536]{0}', space=vmem, size = 0x10000, scoped, tag = 'input window, operand 3, single buffered']
    #allocation5 [shape = 's32[1]{0}', space=sflag, size = 0x4, scoped, tag = 'scoped memory for tpu_custom_call.1']
    #allocation6 [shape = 's32[1]{0}', space=sflag, size = 0x4, scoped, tag = 'scoped memory for tpu_custom_call.1']
    #allocation7 [shape = 'u8[4096]{0}', space=vmem, size = 0x1000, scoped, tag = 'output window, operand 0, single buffered']
    %11 = vsyncpa [#allocation5], 0
    %12 = vsyncpa [#allocation6], 0
    // Predicated region
    $region2: #{tpu_custom_call.1} parent=1 // pred_check
      _
    $region3: #{tpu_custom_call.1} parent=1 // pred_check_branch
      %14 = sbr.rel (0) target = $region5
    $region4: #{tpu_custom_call.1} parent=1 // pred_region
      _
    $region5: #{tpu_custom_call.1} parent=1 // pred_fallthru
      _
    // Predicated region
    $region6: #{tpu_custom_call.1} parent=1 // pred_check
      _
    $region7: #{tpu_custom_call.1} parent=1 // pred_check_branch
      %16 = sbr.rel (0) target = $region9
    $region8: #{tpu_custom_call.1} parent=1 // pred_region
      _
    $region9: #{tpu_custom_call.1} parent=1 // pred_fallthru
      _
    // Predicated region
    $region10: #{tpu_custom_call.1} parent=1 // pred_check
      _
    $region11: #{tpu_custom_call.1} parent=1 // pred_check_branch
      %18 = sbr.rel (0) target = $region13
    $region12: #{tpu_custom_call.1} parent=1 // pred_region
      _
    $region13: #{tpu_custom_call.1} parent=1 // pred_fallthru
      _
    // Predicated region
    $region14: #{tpu_custom_call.1} parent=1 // pred_check
      _
    $region15: #{tpu_custom_call.1} parent=1 // pred_check_branch
      %20 = sbr.rel (0) target = $region17
    $region16: #{tpu_custom_call.1} parent=1 // pred_region
      %22 = vsyncadd [#allocation5], 0
      %s23 = sshll.u32 %s3, 4
      %s24 = int_to_ptr.hbm [resolvable:$true] %s23
      %s25 = sshll.u32 [#allocation4], 4
      %s26 = int_to_ptr.vmem [resolvable:$true] %s25
      %31 = dma.hbm_to_vmem [thread:$0]  %s24, 2048, %s26, [#allocation5], 128, 128, 8
    $region17: #{tpu_custom_call.1} parent=1 // pred_fallthru
      _
    // Predicated region
    $region18: #{tpu_custom_call.1} parent=1 // pred_check
      _
    $region19: #{tpu_custom_call.1} parent=1 // pred_check_branch
      %33 = sbr.rel (0) target = $region21
    $region20: #{tpu_custom_call.1} parent=1 // pred_region
      _
    $region21: #{tpu_custom_call.1} parent=1 // pred_fallthru
      _
    // Predicated region
    $region22: #{tpu_custom_call.1} parent=1 // pred_check
      _
    $region23: #{tpu_custom_call.1} parent=1 // pred_check_branch
      %35 = sbr.rel (0) target = $region25
    $region24: #{tpu_custom_call.1} parent=1 // pred_region
      _
    $region25: #{tpu_custom_call.1} parent=1 // pred_fallthru
      _
    // Predicated region
    $region26: #{tpu_custom_call.1} parent=1 // pred_check
      _
    $region27: #{tpu_custom_call.1} parent=1 // pred_check_branch
      %37 = sbr.rel (0) target = $region29
    $region28: #{tpu_custom_call.1} parent=1 // pred_region
      %39 = dma.done [#allocation5], 2048
    $region29: #{tpu_custom_call.1} parent=1 // pred_fallthru
      _
    %p40 = scmp.eq.s32.totalorder 0, 0
    %p41 = scmp.eq.s32.totalorder 0, 0
    %p42 = pnand %p40, %p41
    %p43 = pneg %p42
    // Predicated region
    $region30: #{tpu_custom_call.1} parent=1 // pred_check
      _
    $region31: #{tpu_custom_call.1} parent=1 // pred_check_branch
      %45 = sbr.rel (%p42) target = $region33
    $region32: #{tpu_custom_call.1} parent=1 // pred_region
      %46 = vst [vmem:[#allocation3] sm:$0xff] 0.0
    $region33: #{tpu_custom_call.1} parent=1 // pred_fallthru
      _
    // Predicated region
    $region34: #{tpu_custom_call.1} parent=1 // pred_check
      %p47 = pneg %p41
    $region35: #{tpu_custom_call.1} parent=1 // pred_check_branch
      %49 = sbr.rel (%p47) target = $region37
    $region36: #{tpu_custom_call.1} parent=1 // pred_region
      %50 = vst [vmem:[#allocation2] sm:$0xff] 0.0
    $region37: #{tpu_custom_call.1} parent=1 // pred_fallthru
      _
    %v51 = vld [vmem:[%s0] sm:$0xff]
    %v52 = vld [vmem:[%s0 + $0x8] sm:$0xff]
    %v53 = vld [vmem:[%s0 + $0x10] sm:$0xff]
    %v54 = vld [vmem:[%s0 + $0x18] sm:$0xff]
    %v55 = vld [vmem:[%s0 + $0x20] sm:$0xff]
    %v56 = vld [vmem:[%s0 + $0x28] sm:$0xff]
    %v57 = vld [vmem:[%s0 + $0x30] sm:$0xff]
    %v58 = vld [vmem:[%s0 + $0x38] sm:$0xff]
    %v59 = vld [vmem:[%s0 + $0x40] sm:$0xff]
    %v60 = vld [vmem:[%s0 + $0x48] sm:$0xff]
    %v61 = vld [vmem:[%s0 + $0x50] sm:$0xff]
    %v62 = vld [vmem:[%s0 + $0x58] sm:$0xff]
    %v63 = vld [vmem:[%s0 + $0x60] sm:$0xff]
    %v64 = vld [vmem:[%s0 + $0x68] sm:$0xff]
    %v65 = vld [vmem:[%s0 + $0x70] sm:$0xff]
    %v66 = vld [vmem:[%s0 + $0x78] sm:$0xff]
    %v67 = vld [vmem:[%s1] sm:$0x1]
    %v68 = vlaneseq
    %v69 = vshrl.u32 %v68, 7
    %v70 = vperm.slane %v67, 0
    %vm71 = vcmp.eq.s32.totalorder %v69, %v70
    %v72 = vsel %vm71, 1, 0
    %v73 = vcvt.s32.f32 %v72
    %v74 = vpack.c.bf16 %v73, %v73
    %s75 = smul.u32 0, 128
    %v76 = vstv %s75
    %v77 = vsub.s32 %v51, %v76
    %v78 = vsub.s32 %v52, %v76
    %v79 = vsub.s32 %v53, %v76
    %v80 = vsub.s32 %v54, %v76
    %v81 = vsub.s32 %v55, %v76
    %v82 = vsub.s32 %v56, %v76
    %v83 = vsub.s32 %v57, %v76
    %v84 = vsub.s32 %v58, %v76
    %v85 = vsub.s32 %v59, %v76
    %v86 = vsub.s32 %v60, %v76
    %v87 = vsub.s32 %v61, %v76
    %v88 = vsub.s32 %v62, %v76
    %v89 = vsub.s32 %v63, %v76
    %v90 = vsub.s32 %v64, %v76
    %v91 = vsub.s32 %v65, %v76
    %v92 = vsub.s32 %v66, %v76
    %v93 = vlaneseq
    %v94 = vand.u32 %v93, 127
    %95 = vset.pattern.permute.xlu0 0
    %96 = vperm.xlu0 %95, %v77
    %v97 = vpop.permute.xlu0 %96
    %98 = vset.pattern.permute.xlu0 0
    %99 = vperm.xlu0 %98, %v78
    %v100 = vpop.permute.xlu0 %99
    %101 = vset.pattern.permute.xlu0 0
    %102 = vperm.xlu0 %101, %v79
    %v103 = vpop.permute.xlu0 %102
    %104 = vset.pattern.permute.xlu0 0
    %105 = vperm.xlu0 %104, %v80
    %v106 = vpop.permute.xlu0 %105
    %107 = vset.pattern.permute.xlu0 0
    %108 = vperm.xlu0 %107, %v81
    %v109 = vpop.permute.xlu0 %108
    %110 = vset.pattern.permute.xlu0 0
    %111 = vperm.xlu0 %110, %v82
    %v112 = vpop.permute.xlu0 %111
    %113 = vset.pattern.permute.xlu0 0
    %114 = vperm.xlu0 %113, %v83
    %v115 = vpop.permute.xlu0 %114
    %116 = vset.pattern.permute.xlu0 0
    %117 = vperm.xlu0 %116, %v84
    %v118 = vpop.permute.xlu0 %117
    %119 = vset.pattern.permute.xlu0 0
    %120 = vperm.xlu0 %119, %v85
    %v121 = vpop.permute.xlu0 %120
    %122 = vset.pattern.permute.xlu0 0
    %123 = vperm.xlu0 %122, %v86
    %v124 = vpop.permute.xlu0 %123
    %125 = vset.pattern.permute.xlu0 0
    %126 = vperm.xlu0 %125, %v87
    %v127 = vpop.permute.xlu0 %126
    %128 = vset.pattern.permute.xlu0 0
    %129 = vperm.xlu0 %128, %v88
    %v130 = vpop.permute.xlu0 %129
    %131 = vset.pattern.permute.xlu0 0
    %132 = vperm.xlu0 %131, %v89
    %v133 = vpop.permute.xlu0 %132
    %134 = vset.pattern.permute.xlu0 0
    %135 = vperm.xlu0 %134, %v90
    %v136 = vpop.permute.xlu0 %135
    %137 = vset.pattern.permute.xlu0 0
    %138 = vperm.xlu0 %137, %v91
    %v139 = vpop.permute.xlu0 %138
    %140 = vset.pattern.permute.xlu0 0
    %141 = vperm.xlu0 %140, %v92
    %v142 = vpop.permute.xlu0 %141
    %vm143 = vcmp.eq.s32.totalorder %v94, %v97
    %vm144 = vcmp.eq.s32.totalorder %v94, %v100
    %vm145 = vcmp.eq.s32.totalorder %v94, %v103
    %vm146 = vcmp.eq.s32.totalorder %v94, %v106
    %vm147 = vcmp.eq.s32.totalorder %v94, %v109
    %vm148 = vcmp.eq.s32.totalorder %v94, %v112
    %vm149 = vcmp.eq.s32.totalorder %v94, %v115
    %vm150 = vcmp.eq.s32.totalorder %v94, %v118
    %vm151 = vcmp.eq.s32.totalorder %v94, %v121
    %vm152 = vcmp.eq.s32.totalorder %v94, %v124
    %vm153 = vcmp.eq.s32.totalorder %v94, %v127
    %vm154 = vcmp.eq.s32.totalorder %v94, %v130
    %vm155 = vcmp.eq.s32.totalorder %v94, %v133
    %vm156 = vcmp.eq.s32.totalorder %v94, %v136
    %vm157 = vcmp.eq.s32.totalorder %v94, %v139
    %vm158 = vcmp.eq.s32.totalorder %v94, %v142
    %v159 = vsel %vm143, 1, 0
    %v160 = vsel %vm144, 1, 0
    %v161 = vsel %vm145, 1, 0
    %v162 = vsel %vm146, 1, 0
    %v163 = vsel %vm147, 1, 0
    %v164 = vsel %vm148, 1, 0
    %v165 = vsel %vm149, 1, 0
    %v166 = vsel %vm150, 1, 0
    %v167 = vsel %vm151, 1, 0
    %v168 = vsel %vm152, 1, 0
    %v169 = vsel %vm153, 1, 0
    %v170 = vsel %vm154, 1, 0
    %v171 = vsel %vm155, 1, 0
    %v172 = vsel %vm156, 1, 0
    %v173 = vsel %vm157, 1, 0
    %v174 = vsel %vm158, 1, 0
    %v175 = vcvt.s32.f32 %v159
    %v176 = vcvt.s32.f32 %v160
    %v177 = vcvt.s32.f32 %v161
    %v178 = vcvt.s32.f32 %v162
    %v179 = vcvt.s32.f32 %v163
    %v180 = vcvt.s32.f32 %v164
    %v181 = vcvt.s32.f32 %v165
    %v182 = vcvt.s32.f32 %v166
    %v183 = vcvt.s32.f32 %v167
    %v184 = vcvt.s32.f32 %v168
    %v185 = vcvt.s32.f32 %v169
    %v186 = vcvt.s32.f32 %v170
    %v187 = vcvt.s32.f32 %v171
    %v188 = vcvt.s32.f32 %v172
    %v189 = vcvt.s32.f32 %v173
    %v190 = vcvt.s32.f32 %v174
    %v191 = vpack.c.bf16 %v176, %v175
    %v192 = vpack.c.bf16 %v178, %v177
    %v193 = vpack.c.bf16 %v180, %v179
    %v194 = vpack.c.bf16 %v182, %v181
    %v195 = vpack.c.bf16 %v184, %v183
    %v196 = vpack.c.bf16 %v186, %v185
    %v197 = vpack.c.bf16 %v188, %v187
    %v198 = vpack.c.bf16 %v190, %v189
    %v199 = vld [vmem:[#allocation2] sm:$0xff]
    %200 = vmatpush.bf16.msra.mxu0 %v198
    %201 = vmatpush.bf16.msra.mxu0 %v197
    %202 = vmatpush.bf16.msra.mxu0 %v196
    %203 = vmatpush.bf16.msra.mxu0 %v195
    %204 = vmatpush.bf16.msra.mxu0 %v194
    %205 = vmatpush.bf16.msra.mxu0 %v193
    %206 = vmatpush.bf16.msra.mxu0 %v192
    %207 = vmatpush.bf16.msra.mxu0 %v191
    %208 = vmatmul.bf16.gmra.mxu0 %v74
    %v209 = vpop.f32.mrf.mxu0
    %v210 = vadd.f32 0.0, %v209
    %v211 = vpop.f32.mrf.mxu0
    %212 = vdwg.mxu0
    %v213 = vadd.f32 %v199, %v210
    %214 = vst [vmem:[#allocation2] sm:$0xff] %v213
    // Predicated region
    $region38: #{tpu_custom_call.1} parent=1 // pred_check
      %p215 = pneg %p41
    $region39: #{tpu_custom_call.1} parent=1 // pred_check_branch
      %217 = sbr.rel (%p215) target = $region41
    $region40: #{tpu_custom_call.1} parent=1 // pred_region
      %v218 = vld [vmem:[#allocation3] sm:$0xff]
      %v219 = vld [vmem:[#allocation2] sm:$0xff]
      %v220 = vld [vmem:[%s2] sm:$0xff]
      %v221 = vld [vmem:[%s2 + $0x8] sm:$0xff]
      %v222 = vld [vmem:[%s2 + $0x10] sm:$0xff]
      %v223 = vld [vmem:[%s2 + $0x18] sm:$0xff]
      %v224 = vld [vmem:[%s2 + $0x20] sm:$0xff]
      %v225 = vld [vmem:[%s2 + $0x28] sm:$0xff]
      %v226 = vld [vmem:[%s2 + $0x30] sm:$0xff]
      %v227 = vld [vmem:[%s2 + $0x38] sm:$0xff]
      %v228 = vld [vmem:[%s2 + $0x40] sm:$0xff]
      %v229 = vld [vmem:[%s2 + $0x48] sm:$0xff]
      %v230 = vld [vmem:[%s2 + $0x50] sm:$0xff]
      %v231 = vld [vmem:[%s2 + $0x58] sm:$0xff]
      %v232 = vld [vmem:[%s2 + $0x60] sm:$0xff]
      %v233 = vld [vmem:[%s2 + $0x68] sm:$0xff]
      %v234 = vld [vmem:[%s2 + $0x70] sm:$0xff]
      %v235 = vld [vmem:[%s2 + $0x78] sm:$0xff]
      %236 = vmatpush.msra.mxu0 %v235
      %237 = vmatpush.msra.mxu0 %v234
      %238 = vmatpush.msra.mxu0 %v233
      %239 = vmatpush.msra.mxu0 %v232
      %240 = vmatpush.msra.mxu0 %v231
      %241 = vmatpush.msra.mxu0 %v230
      %242 = vmatpush.msra.mxu0 %v229
      %243 = vmatpush.msra.mxu0 %v228
      %244 = vmatpush.msra.mxu0 %v227
      %245 = vmatpush.msra.mxu0 %v226
      %246 = vmatpush.msra.mxu0 %v225
      %247 = vmatpush.msra.mxu0 %v224
      %248 = vmatpush.msra.mxu0 %v223
      %249 = vmatpush.msra.mxu0 %v222
      %250 = vmatpush.msra.mxu0 %v221
      %251 = vmatpush.msra.mxu0 %v220
      %252 = vmatmul.f32.gmra.mxu0 %v219
      %v253 = vpop.f32.mrf.mxu0
      %v254 = vadd.f32 0.0, %v253
      %255 = vdwg.mxu0
      %v256 = vadd.f32 %v218, %v254
      %257 = vst [vmem:[#allocation3] sm:$0xff] %v256
    $region41: #{tpu_custom_call.1} parent=1 // pred_fallthru
      _
    // Predicated region
    $region42: #{tpu_custom_call.1} parent=1 // pred_check
      _
    $region43: #{tpu_custom_call.1} parent=1 // pred_check_branch
      %259 = sbr.rel (%p42) target = $region45
    $region44: #{tpu_custom_call.1} parent=1 // pred_region
      %v260 = vld [vmem:[#allocation3] sm:$0xff]
      %v261 = vld [vmem:[%s5] sm:$0xff]
      %263 = vset.pattern.permute.xlu0 0
      %264 = vperm.xlu0 %263, %v261
      %v265 = vpop.permute.xlu0 %264
      %v267 = vmul.f32 %v260, %v265
      %v268 = vld [vmem:[#allocation4] sm:$0xff]
      %v269 = vld [vmem:[#allocation4 + $0x8] sm:$0xff]
      %v270 = vld [vmem:[#allocation4 + $0x10] sm:$0xff]
      %v271 = vld [vmem:[#allocation4 + $0x18] sm:$0xff]
      %v272 = vld [vmem:[#allocation4 + $0x20] sm:$0xff]
      %v273 = vld [vmem:[#allocation4 + $0x28] sm:$0xff]
      %v274 = vld [vmem:[#allocation4 + $0x30] sm:$0xff]
      %v275 = vld [vmem:[#allocation4 + $0x38] sm:$0xff]
      %v276 = vld [vmem:[#allocation4 + $0x40] sm:$0xff]
      %v277 = vld [vmem:[#allocation4 + $0x48] sm:$0xff]
      %v278 = vld [vmem:[#allocation4 + $0x50] sm:$0xff]
      %v279 = vld [vmem:[#allocation4 + $0x58] sm:$0xff]
      %v280 = vld [vmem:[#allocation4 + $0x60] sm:$0xff]
      %v281 = vld [vmem:[#allocation4 + $0x68] sm:$0xff]
      %v282 = vld [vmem:[#allocation4 + $0x70] sm:$0xff]
      %v283 = vld [vmem:[#allocation4 + $0x78] sm:$0xff]
      %v284 = vld [vmem:[%s4] sm:$0x1]
      %v286 = vperm.slane %v284, 0
      %288 = vmatpush.msra.mxu0 %v283
      %289 = vmatpush.msra.mxu0 %v282
      %290 = vmatpush.msra.mxu0 %v281
      %291 = vmatpush.msra.mxu0 %v280
      %292 = vmatpush.msra.mxu0 %v279
      %293 = vmatpush.msra.mxu0 %v278
      %294 = vmatpush.msra.mxu0 %v277
      %295 = vmatpush.msra.mxu0 %v276
      %296 = vmatpush.msra.mxu0 %v275
      %297 = vmatpush.msra.mxu0 %v274
      %298 = vmatpush.msra.mxu0 %v273
      %299 = vmatpush.msra.mxu0 %v272
      %300 = vmatpush.msra.mxu0 %v271
      %301 = vmatpush.msra.mxu0 %v270
      %302 = vmatpush.msra.mxu0 %v269
      %303 = vmatpush.msra.mxu0 %v268
      %304 = vmatmul.f32.gmra.mxu0 %v267
      %v305 = vpop.f32.mrf.mxu0
      %v306 = vadd.f32 %v286, %v305
      %307 = vdwg.mxu0
      %308 = vst [vmem:[#allocation7] sm:$0xff] %v306
    $region45: #{tpu_custom_call.1} parent=1 // pred_fallthru
      _
    // Predicated region
    $region46: #{tpu_custom_call.1} parent=1 // pred_check
      _
    $region47: #{tpu_custom_call.1} parent=1 // pred_check_branch
      %310 = sbr.rel (0) target = $region49
    $region48: #{tpu_custom_call.1} parent=1 // pred_region
      %312 = vsyncadd [#allocation6], 0
      %s314 = sshll.u32 [#allocation7], 4
      %s315 = int_to_ptr.vmem [resolvable:$true] %s314
      %s316 = sshll.u32 %s6, 4
      %s317 = int_to_ptr.hbm [resolvable:$true] %s316
      %319 = dma.vmem_to_hbm [thread:$0]  %s315, 128, %s317, [#allocation6]
    $region49: #{tpu_custom_call.1} parent=1 // pred_fallthru
      _
    // Predicated region
    $region50: #{tpu_custom_call.1} parent=1 // pred_check
      _
    $region51: #{tpu_custom_call.1} parent=1 // pred_check_branch
      %321 = sbr.rel (0) target = $region53
    $region52: #{tpu_custom_call.1} parent=1 // pred_region
      %323 = dma.done [#allocation6], 128
    $region53: #{tpu_custom_call.1} parent=1 // pred_fallthru
      _
    %324 = vsyncpa [#allocation5], 1
    %325 = vsyncpa [#allocation6], 1

</llo_original>
